<compile_context>
chip_gen: v6e
topology: v6e:2x2x1
jax: 0.10.0
libtpu: 0.0.40
codegen_flags: <defaults>
</compile_context>

<pallas_src>
import jax
import jax.numpy as jnp
from jax.experimental import pallas as pl
from jax.experimental.pallas import tpu as pltpu


def _exp_kernel(x_ref, y_ref):
    # Y = exp(X). Compute in f32, cast on store; EUP work, kernel is HBM-bound.
    x = x_ref[...]
    y_ref[...] = jnp.exp(x.astype(jnp.float32)).astype(y_ref.dtype)


_LANE_WIDTHS = (1024, 512, 256, 128)
# ~2 MiB per tile: with 1 input + 1 output, double-buffered => ~8 MiB of VMEM,
# safe on v5e (16 MiB scoped default), v6e (32 MiB) and v7x (64 MiB physical).
_TILE_BYTES_TARGET = 2 * 1024 * 1024


def _exp_pallas_2d(x2d):
    rows, w = x2d.shape
    itemsize = jnp.dtype(x2d.dtype).itemsize
    # Largest multiple-of-8 row-tile within the byte budget.
    tm_cap = max(8, (_TILE_BYTES_TARGET // (w * itemsize)) // 8 * 8)
    # tm == rows uses the full-dim exception to the (8,128) rule for small arrays;
    # otherwise tm is a multiple of 8 and the last (partial) block is masked.
    tm = min(rows, tm_cap)
    grid = (pl.cdiv(rows, tm),)

    return pl.pallas_call(
        _exp_kernel,
        out_shape=jax.ShapeDtypeStruct((rows, w), x2d.dtype),
        grid_spec=pltpu.PrefetchScalarGridSpec(
            num_scalar_prefetch=0,
            grid=grid,
            in_specs=[pl.BlockSpec((tm, w), lambda i: (i, 0))],
            out_specs=pl.BlockSpec((tm, w), lambda i: (i, 0)),
        ),
        compiler_params=pltpu.CompilerParams(
            dimension_semantics=("parallel",),
            vmem_limit_bytes=32 * 1024 * 1024,
        ),
    )(x2d)


def variable_transformation(x):
    """Returns (Y, log_jac) with Y = exp(X) and log_jac = X (elementwise)."""
    n = x.size
    # log-Jacobian of exp is the identity map: return X directly (zero extra
    # HBM traffic, no kernel output needed).
    log_jac = x

    lane_w = next((w for w in _LANE_WIDTHS if n % w == 0), None)
    if lane_w is not None:
        # Hot path: pure reshape to a lane-dense 2D slab, no pad / slice passes.
        y = _exp_pallas_2d(x.reshape(n // lane_w, lane_w)).reshape(x.shape)
    else:
        # Rare fallback for element counts not divisible by 128: one pad pass.
        lane_w = 128
        pad = (-n) % lane_w
        flat = jnp.concatenate(
            [x.reshape(-1), jnp.zeros((pad,), dtype=x.dtype)], axis=0
        )
        y2d = _exp_pallas_2d(flat.reshape(-1, lane_w))
        y = y2d.reshape(-1)[:n].reshape(x.shape)

    return y, log_jac


if __name__ == "__main__":
    key = jax.random.PRNGKey(0)
    # NCHW input: batch=2, channels=4, spatial=16x16.
    x = jax.random.normal(key, (2, 4, 16, 16), dtype=jnp.float32)

    y, log_jac = variable_transformation(x)
    jax.block_until_ready((y, log_jac))

    # Correctness check against the pure-JAX reference of the chosen transform.
    y_ref = jnp.exp(x)
    lj_ref = x
    assert y.shape == x.shape and log_jac.shape == x.shape
    assert jnp.allclose(y, y_ref, atol=1e-6, rtol=1e-6)
    assert jnp.allclose(log_jac, lj_ref, atol=1e-6, rtol=1e-6)

    print("KERNEL_OK")
</pallas_src>

<mosaic_0001>
module attributes {stable_mosaic.version = 11 : i64} {
  func.func @_exp_kernel(%arg0: i32, %arg1: memref<2x1024xf32, #tpu.memory_space<vmem>>, %arg2: memref<2x1024xf32, #tpu.memory_space<vmem>>) attributes {dimension_semantics = [#tpu.dimension_semantics<parallel>], iteration_bounds = array<i64: 1>, scalar_prefetch = 0 : i64, scratch_operands = 0 : i64, tpu.core_type = #tpu.core_type<tc>, window_params = [{transform_indices = @transform_0, window_bounds = array<i64: 2, 1024>}, {transform_indices = @transform_1, window_bounds = array<i64: 2, 1024>}]} {
    %c0 = arith.constant 0 : index
    %c0_0 = arith.constant 0 : index
    %0 = vector.load %arg1[%c0, %c0_0] : memref<2x1024xf32, #tpu.memory_space<vmem>>, vector<2x1024xf32>
    %1 = math.exp %0 : vector<2x1024xf32>
    %c0_1 = arith.constant 0 : index
    %c0_2 = arith.constant 0 : index
    %2 = vector.load %arg2[%c0_1, %c0_2] : memref<2x1024xf32, #tpu.memory_space<vmem>>, vector<2x1024xf32>
    tpu.vector_store %arg2[%c0_1, %c0_2], %1 {strides = array<i32>} : memref<2x1024xf32, #tpu.memory_space<vmem>>, vector<2x1024xf32>,
    return
  }
  func.func @transform_0(%arg0: i32) -> (i32, i32) {
    %c0_i32 = arith.constant 0 : i32
    %c0_i32_0 = arith.constant 0 : i32
    return %arg0, %c0_i32 : i32, i32
  }
  func.func @transform_1(%arg0: i32) -> (i32, i32) {
    %c0_i32 = arith.constant 0 : i32
    %c0_i32_0 = arith.constant 0 : i32
    return %arg0, %c0_i32 : i32, i32
  }
}

</mosaic_0001>

<llo_original>
// kernel: tpu_custom_call.1
$region0: #{tpu_custom_call.1}
  #allocation0 [shape = 'u32[]', space=smem, size = 0x4, offset = 0x4, fixed_abs, tag = 'smem constant byte address 0x4 - core index']
  #allocation1 [shape = 'u32[144,128]{1,0:T(1,128)}', space=vmem, size = 0x12000, scoped, tag = 'internal scratch']
  %s0 = inlined_call_operand.hbm [shape: f32[2,1024], index: 0, kind: input, shape index: {}]
  %s1 = inlined_call_operand.hbm [shape: f32[2,1024], index: 1, kind: output, shape index: {}]
  %s2 = sld [smem:[#allocation0]]
  $region18: #{tpu_custom_call.1} parent=0
    _
  %s4 = ssub.s32 1, %s2
  %s5 = scalar_select 0, %s4, %s2
  $region1: #{tpu_custom_call.1} parent=0
    #allocation2 [shape = 'u8[8192]{0}', space=vmem, size = 0x2000, scoped, tag = 'input window, operand 0, single buffered']
    #allocation3 [shape = 's32[1]{0}', space=sflag, size = 0x4, scoped, tag = 'scoped memory for tpu_custom_call.1']
    #allocation4 [shape = 's32[1]{0}', space=sflag, size = 0x4, scoped, tag = 'scoped memory for tpu_custom_call.1']
    #allocation5 [shape = 'u8[8192]{0}', space=vmem, size = 0x2000, scoped, tag = 'output window, operand 0, single buffered']
    %6 = vsyncpa [#allocation3], 0
    %7 = vsyncpa [#allocation4], 0
    // Predicated region
    $region2: #{tpu_custom_call.1} parent=1 // pred_check
      _
    $region3: #{tpu_custom_call.1} parent=1 // pred_check_branch
      %9 = sbr.rel (0) target = $region5
    $region4: #{tpu_custom_call.1} parent=1 // pred_region
      %s11 = ssub.s32 256, 256
      %12 = vsyncadd [#allocation3], %s11
      %s14 = sshll.u32 [#allocation2], 4
      %s15 = int_to_ptr.vmem [resolvable:$true] %s14
      %17 = dma.hbm_to_vmem [thread:$0]  %s0, 256, %s15, [#allocation3]
    $region5: #{tpu_custom_call.1} parent=1 // pred_fallthru
      _
    // Predicated region
    $region6: #{tpu_custom_call.1} parent=1 // pred_check
      _
    $region7: #{tpu_custom_call.1} parent=1 // pred_check_branch
      %19 = sbr.rel (0) target = $region9
    $region8: #{tpu_custom_call.1} parent=1 // pred_region
      %20 = dma.done [#allocation3], 256
    $region9: #{tpu_custom_call.1} parent=1 // pred_fallthru
      _
    %v21 = vld [vmem:[#allocation2] sm:$0xff]
    %v22 = vld [vmem:[#allocation2 + $0x8] sm:$0xff]
    %v23 = vmul.f32 %v21, 1.442695
    %v24 = vpow.pop %v23
    %v25 = vmul.f32 %v22, 1.442695
    %v26 = vpow.pop %v25
    %27 = vst [vmem:[#allocation5] sm:$0xff] %v24
    %28 = vst [vmem:[#allocation5 + $0x8] sm:$0xff] %v26
    // Predicated region
    $region10: #{tpu_custom_call.1} parent=1 // pred_check
      _
    $region11: #{tpu_custom_call.1} parent=1 // pred_check_branch
      %30 = sbr.rel (0) target = $region13
    $region12: #{tpu_custom_call.1} parent=1 // pred_region
      %s32 = ssub.s32 256, 256
      %33 = vsyncadd [#allocation4], %s32
      %s35 = sshll.u32 [#allocation5], 4
      %s36 = int_to_ptr.vmem [resolvable:$true] %s35
      %38 = dma.vmem_to_hbm [thread:$0]  %s36, 256, %s1, [#allocation4]
    $region13: #{tpu_custom_call.1} parent=1 // pred_fallthru
      _
    // Predicated region
    $region14: #{tpu_custom_call.1} parent=1 // pred_check
      _
    $region15: #{tpu_custom_call.1} parent=1 // pred_check_branch
      %40 = sbr.rel (0) target = $region17
    $region16: #{tpu_custom_call.1} parent=1 // pred_region
      %41 = dma.done [#allocation4], 256
    $region17: #{tpu_custom_call.1} parent=1 // pred_fallthru
      _
    %42 = vsyncpa [#allocation3], 1
    %43 = vsyncpa [#allocation4], 1

</llo_original>
